<compile_context>
chip_gen: v7x
topology: tpu7x:2x2x1
jax: 0.10.0
libtpu: 0.0.40
codegen_flags: <defaults>
</compile_context>

<pallas_src>
import functools

import jax
import jax.numpy as jnp
from jax import lax
from jax.experimental import pallas as pl
from jax.experimental.pallas import tpu as pltpu


def _round_up(x, m):
    return (x + m - 1) // m * m


def prepare_text_embeds(text_embeds):
    """One-time (init_text_embeds-time) preparation of the static label matrix.

    Pads (L, D) -> (L_pad, D_pad) with L_pad % 128 == 0 and D_pad % 128 == 0 so
    every per-call forward() sees an already lane-aligned f32 matrix and never
    re-pads / re-casts it. Returns (txt_padded, L, D).
    """
    L, D = text_embeds.shape
    L_pad = _round_up(max(L, 128), 128)
    D_pad = _round_up(D, 128)
    txt = jnp.zeros((L_pad, D_pad), jnp.float32).at[:L, :D].set(
        text_embeds.astype(jnp.float32))
    return txt, L, D


def _clip_multilabel_kernel(scalars_ref, img_ref, txt_ref, probs_ref, labels_ref,
                            *, n_rows, n_labels):
    # scalars_ref: (2,) f32 in SMEM -> [exp(logit_scale), clf_thresh]
    logit_scale = scalars_ref[0]          # already exponentiated on host
    clf_thresh = scalars_ref[1]

    # ---- Step 1: L2-normalize image embeddings (f32, VPU/EUP) ----
    x = img_ref[...].astype(jnp.float32)                     # (B, D_pad)
    sumsq = jnp.sum(x * x, axis=-1, keepdims=True)
    x_n = x * lax.rsqrt(sumsq)                               # matches x / ||x||

    # ---- Step 2: logits = x_n @ text.T * exp(logit_scale) (f32 MXU acc) ----
    # Contract on D of BOTH operands -> no in-kernel transpose of text_embeds.
    logits = lax.dot_general(
        x_n, txt_ref[...],
        dimension_numbers=(((1,), (1,)), ((), ())),
        preferred_element_type=jnp.float32)                  # (B, L_pad)
    logits = logits * logit_scale

    l_pad = logits.shape[-1]
    if n_labels != l_pad:
        # Only emitted when the label axis was padded; finite sentinel avoids
        # inf-arithmetic (NaN) hazards while contributing ~0 to the softmax.
        col_ids = lax.broadcasted_iota(jnp.int32, logits.shape, 1)
        logits = jnp.where(col_ids < n_labels, logits,
                           jnp.finfo(jnp.float32).min)

    # ---- Step 3: numerically-stable softmax over labels (f32, exact divide) ----
    row_max = jnp.max(logits, axis=-1, keepdims=True)
    e = jnp.exp(logits - row_max)
    denom = jnp.sum(e, axis=-1, keepdims=True)
    probs = e / denom                                        # (B, L_pad)

    # ---- Step 4: (probs[global] + max over crop rows) / 2 (static slice) ----
    if n_rows > 1:
        crop_max = jnp.max(probs[1:n_rows], axis=0, keepdims=True)
        fused = 0.5 * (probs[0:1, :] + crop_max)             # (1, L_pad)
    else:
        fused = probs[0:1, :]                                # no crops: global only

    # ---- Step 5: threshold -> int32 labels (lane-dense, unmasked stores) ----
    probs_ref[...] = fused
    labels_ref[...] = (fused > clf_thresh).astype(jnp.int32)


def clip_multilabel_head(image_embeds, txt_prepared, logit_scale, num_labels,
                         clf_thresh=0.5):
    """Pallas TPU head of CLIPMultilabelClassifier.forward().

    image_embeds: (B, D) unnormalized; row 0 = global image, rows 1: = crops.
    txt_prepared: (L_pad, D_pad) f32 from prepare_text_embeds() (static, padded once).
    logit_scale:  raw (pre-exp) scalar; exponentiated here (cheap scalar op).
    num_labels:   original L (Python int) — used to slice padded outputs.
    Returns (labels int32 (L,), probs f32 (L,)).
    """
    B, D = image_embeds.shape
    L_pad, D_pad = txt_prepared.shape

    if D != D_pad:
        # Rare path (CLIP projection dims 256/512/768 are already lane-aligned).
        img = jnp.zeros((B, D_pad), jnp.float32).at[:, :D].set(
            image_embeds.astype(jnp.float32))
    else:
        img = image_embeds.astype(jnp.float32)

    scalars = jnp.stack([jnp.exp(jnp.asarray(logit_scale, jnp.float32)),
                         jnp.asarray(clf_thresh, jnp.float32)])

    kernel = functools.partial(
        _clip_multilabel_kernel, n_rows=B, n_labels=num_labels)

    cost = pl.CostEstimate(
        flops=2 * B * D_pad * L_pad + 8 * B * L_pad + 3 * B * D_pad,
        transcendentals=B * L_pad + B,
        bytes_accessed=4 * (B * D_pad + L_pad * D_pad + 2 + 2 * L_pad),
    )

    probs_pad, labels_pad = pl.pallas_call(
        kernel,
        out_shape=(jax.ShapeDtypeStruct((1, L_pad), jnp.float32),
                   jax.ShapeDtypeStruct((1, L_pad), jnp.int32)),
        in_specs=[
            pl.BlockSpec(memory_space=pltpu.MemorySpace.SMEM),   # scalars
            pl.BlockSpec(memory_space=pltpu.MemorySpace.VMEM),   # image embeds (full)
            pl.BlockSpec(memory_space=pltpu.MemorySpace.VMEM),   # text embeds (full)
        ],
        out_specs=(
            pl.BlockSpec(memory_space=pltpu.MemorySpace.VMEM),
            pl.BlockSpec(memory_space=pltpu.MemorySpace.VMEM),
        ),
        cost_estimate=cost,
    )(scalars, img, txt_prepared)

    return labels_pad[0, :num_labels], probs_pad[0, :num_labels]


def _reference(image_embeds, text_embeds, logit_scale, clf_thresh=0.5):
    x = image_embeds / jnp.linalg.norm(image_embeds, axis=-1, keepdims=True)
    logits = (x @ text_embeds.T) * jnp.exp(logit_scale)
    probs = jax.nn.softmax(logits, axis=-1)
    fused = 0.5 * (probs[0] + jnp.max(probs[1:], axis=0))
    labels = (fused > clf_thresh).astype(jnp.int32)
    return labels, fused


if __name__ == "__main__":
    key = jax.random.PRNGKey(0)
    k1, k2 = jax.random.split(key)

    # choice=(2,2) -> 4 crops + 1 global image; CLIP-ish embed dim and labels.
    B, D, L = 1 + 2 * 2, 256, 200
    image_embeds = jax.random.normal(k1, (B, D), jnp.float32)
    text_embeds = jax.random.normal(k2, (L, D), jnp.float32)
    text_embeds = text_embeds / jnp.linalg.norm(text_embeds, axis=-1, keepdims=True)
    logit_scale = jnp.float32(2.6592)   # CLIP init: ln(1/0.07)

    # One-time text preparation (init_text_embeds analogue) — not per-call.
    txt_prepared, L_orig, _ = prepare_text_embeds(text_embeds)
    txt_prepared = jax.block_until_ready(txt_prepared)

    labels, probs = clip_multilabel_head(
        image_embeds, txt_prepared, logit_scale, num_labels=L_orig, clf_thresh=0.5)
    labels, probs = jax.block_until_ready((labels, probs))

    ref_labels, ref_probs = _reference(image_embeds, text_embeds, logit_scale, 0.5)
    max_err = float(jnp.max(jnp.abs(probs - ref_probs)))
    assert jnp.allclose(probs, ref_probs, atol=1e-4, rtol=1e-4), max_err
    assert bool(jnp.all(labels == ref_labels))

    print("KERNEL_OK")
</pallas_src>

<mosaic_0001>
module attributes {stable_mosaic.version = 11 : i64} {
  func.func @_clip_multilabel_kernel(%arg0: memref<2xf32, #tpu.memory_space<smem>>, %arg1: memref<5x256xf32, #tpu.memory_space<vmem>>, %arg2: memref<256x256xf32, #tpu.memory_space<vmem>>, %arg3: memref<1x256xf32, #tpu.memory_space<vmem>>, %arg4: memref<1x256xi32, #tpu.memory_space<vmem>>) attributes {dimension_semantics = [], scalar_prefetch = 0 : i64, scratch_operands = 0 : i64, tpu.core_type = #tpu.core_type<tc>} {
    %c0 = arith.constant 0 : index
    %0 = memref.load %arg0[%c0] : memref<2xf32, #tpu.memory_space<smem>>
    %c1 = arith.constant 1 : index
    %1 = memref.load %arg0[%c1] : memref<2xf32, #tpu.memory_space<smem>>
    %c0_0 = arith.constant 0 : index
    %c0_1 = arith.constant 0 : index
    %2 = vector.load %arg1[%c0_0, %c0_1] : memref<5x256xf32, #tpu.memory_space<vmem>>, vector<5x256xf32>
    %3 = arith.mulf %2, %2 : vector<5x256xf32>
    %cst = arith.constant dense<0.000000e+00> : vector<5xf32>
    %4 = vector.multi_reduction <add>, %3, %cst [1] : vector<5x256xf32> to vector<5xf32>
    %5 = vector.shape_cast %4 : vector<5xf32> to vector<5x1xf32>
    %6 = math.rsqrt %5 : vector<5x1xf32>
    %7 = vector.broadcast %6 : vector<5x1xf32> to vector<5x256xf32>
    %8 = arith.mulf %2, %7 : vector<5x256xf32>
    %c0_2 = arith.constant 0 : index
    %c0_3 = arith.constant 0 : index
    %9 = vector.load %arg2[%c0_2, %c0_3] : memref<256x256xf32, #tpu.memory_space<vmem>>, vector<256x256xf32>
    %cst_4 = arith.constant dense<0.000000e+00> : vector<5x256xf32>
    %10 = tpu.matmul %8, %9, %cst_4 {dimension_numbers = #tpu.dot_dimension_numbers<[1], [1], [0], [0], [0, 0, 1, 0], [], []>} : vector<5x256xf32>, vector<256x256xf32>, vector<5x256xf32> -> vector<5x256xf32>
    %11 = vector.broadcast %0 : f32 to vector<5x256xf32>
    %12 = arith.mulf %10, %11 : vector<5x256xf32>
    %13 = tpu.iota {dimensions = array<i32: 1>} : vector<5x256xi32>
    %c200_i32 = arith.constant 200 : i32
    %14 = vector.broadcast %c200_i32 : i32 to vector<5x256xi32>
    %15 = arith.cmpi slt, %13, %14 : vector<5x256xi32>
    %cst_5 = arith.constant -3.40282347E+38 : f32
    %16 = vector.broadcast %cst_5 : f32 to vector<5x256xf32>
    %17 = arith.select %15, %12, %16 : vector<5x256xi1>, vector<5x256xf32>
    %cst_6 = arith.constant dense<0xFF800000> : vector<5xf32>
    %18 = vector.multi_reduction <maximumf>, %17, %cst_6 [1] : vector<5x256xf32> to vector<5xf32>
    %19 = vector.shape_cast %18 : vector<5xf32> to vector<5x1xf32>
    %20 = vector.broadcast %19 : vector<5x1xf32> to vector<5x256xf32>
    %21 = arith.subf %17, %20 : vector<5x256xf32>
    %22 = math.exp %21 : vector<5x256xf32>
    %cst_7 = arith.constant dense<0.000000e+00> : vector<5xf32>
    %23 = vector.multi_reduction <add>, %22, %cst_7 [1] : vector<5x256xf32> to vector<5xf32>
    %24 = vector.shape_cast %23 : vector<5xf32> to vector<5x1xf32>
    %25 = vector.broadcast %24 : vector<5x1xf32> to vector<5x256xf32>
    %26 = arith.divf %22, %25 : vector<5x256xf32>
    %27 = vector.extract_strided_slice %26 {offsets = [1, 0], sizes = [4, 256], strides = [1, 1]} : vector<5x256xf32> to vector<4x256xf32>
    %cst_8 = arith.constant dense<0xFF800000> : vector<256xf32>
    %28 = vector.multi_reduction <maximumf>, %27, %cst_8 [0] : vector<4x256xf32> to vector<256xf32>
    %29 = vector.shape_cast %28 : vector<256xf32> to vector<1x256xf32>
    %30 = vector.extract_strided_slice %26 {offsets = [0, 0], sizes = [1, 256], strides = [1, 1]} : vector<5x256xf32> to vector<1x256xf32>
    %31 = arith.addf %30, %29 : vector<1x256xf32>
    %cst_9 = arith.constant 5.000000e-01 : f32
    %32 = vector.broadcast %cst_9 : f32 to vector<1x256xf32>
    %33 = arith.mulf %32, %31 : vector<1x256xf32>
    %c0_10 = arith.constant 0 : index
    %c0_11 = arith.constant 0 : index
    %34 = vector.load %arg3[%c0_10, %c0_11] : memref<1x256xf32, #tpu.memory_space<vmem>>, vector<1x256xf32>
    tpu.vector_store %arg3[%c0_10, %c0_11], %33 {strides = array<i32>} : memref<1x256xf32, #tpu.memory_space<vmem>>, vector<1x256xf32>,
    %35 = vector.broadcast %1 : f32 to vector<1x256xf32>
    %36 = arith.cmpf ogt, %33, %35 : vector<1x256xf32>
    %37 = arith.extui %36 : vector<1x256xi1> to vector<1x256xi32>
    %c0_12 = arith.constant 0 : index
    %c0_13 = arith.constant 0 : index
    %38 = vector.load %arg4[%c0_12, %c0_13] : memref<1x256xi32, #tpu.memory_space<vmem>>, vector<1x256xi32>
    tpu.vector_store %arg4[%c0_12, %c0_13], %37 {strides = array<i32>} : memref<1x256xi32, #tpu.memory_space<vmem>>, vector<1x256xi32>,
    return
  }
}

</mosaic_0001>

<llo_original>
// kernel: tpu_custom_call.1
$region0: #{tpu_custom_call.1}
  #allocation0 [shape = 'u32[]', space=smem, size = 0x4, offset = 0x4, fixed_abs, tag = 'smem constant byte address 0x4 - core index']
  #allocation1 [shape = 'u32[144,128]{1,0:T(1,128)}', space=vmem, size = 0x12000, scoped, tag = 'internal scratch']
  %s0 = inlined_call_operand.hbm [shape: f32[2], index: 0, kind: input, shape index: {}]
  %s1 = inlined_call_operand.hbm [shape: f32[5,256], index: 1, kind: input, shape index: {}]
  %s2 = inlined_call_operand.hbm [shape: f32[256,256], index: 2, kind: input, shape index: {}]
  %s3 = inlined_call_operand.hbm [shape: f32[1,256], index: 3, kind: output, shape index: {0}]
  %s4 = inlined_call_operand.hbm [shape: s32[1,256], index: 4, kind: output, shape index: {1}]
  %5 = xla_tuple %s3, %s4
  %s6 = sld [smem:[#allocation0]]
  $region42: #{tpu_custom_call.1} parent=0
    _
  %s8 = ssub.s32 1, %s6
  %s9 = scalar_select 0, %s8, %s6
  $region1: #{tpu_custom_call.1} parent=0
    #allocation2 [shape = 'u8[512]{0}', space=smem, size = 0x200, scoped, tag = 'input window, operand 0, single buffered']
    #allocation3 [shape = 's32[1]{0}', space=sflag, size = 0x4, scoped, tag = 'scoped memory for tpu_custom_call.1']
    #allocation4 [shape = 's32[1]{0}', space=sflag, size = 0x4, scoped, tag = 'scoped memory for tpu_custom_call.1']
    #allocation5 [shape = 's32[1]{0}', space=sflag, size = 0x4, scoped, tag = 'scoped memory for tpu_custom_call.1']
    #allocation6 [shape = 'u8[8192]{0}', space=vmem, size = 0x2000, scoped, tag = 'input window, operand 1, single buffered']
    #allocation7 [shape = 'u8[262144]{0}', space=vmem, size = 0x40000, scoped, tag = 'input window, operand 2, single buffered']
    #allocation8 [shape = 's32[1]{0}', space=sflag, size = 0x4, scoped, tag = 'scoped memory for tpu_custom_call.1']
    #allocation9 [shape = 'u8[1024]{0}', space=vmem, size = 0x400, scoped, tag = 'output window, operand 0, single buffered']
    #allocation10 [shape = 'u8[1024]{0}', space=vmem, size = 0x400, scoped, tag = 'output window, operand 1, single buffered']
    #allocation11 [shape = 's32[1]{0}', space=sflag, size = 0x4, scoped, tag = 'scoped memory for tpu_custom_call.1']
    %10 = vsyncpa [#allocation5], 0
    %11 = vsyncpa [#allocation3], 0
    %12 = vsyncpa [#allocation8], 0
    %13 = vsyncpa [#allocation4], 0
    %14 = vsyncpa [#allocation11], 0
    // Predicated region
    $region2: #{tpu_custom_call.1} parent=1 // pred_check
      _
    $region3: #{tpu_custom_call.1} parent=1 // pred_check_branch
      %16 = sbr.rel (0) target = $region5
    $region4: #{tpu_custom_call.1} parent=1 // pred_region
      %s18 = ssub.s32 16, 16
      %19 = vsyncadd [#allocation5], %s18
      %22 = dma.hbm_to_smem %s0, 16, [#allocation2], [#allocation5]
    $region5: #{tpu_custom_call.1} parent=1 // pred_fallthru
      _
    // Predicated region
    $region6: #{tpu_custom_call.1} parent=1 // pred_check
      _
    $region7: #{tpu_custom_call.1} parent=1 // pred_check_branch
      %24 = sbr.rel (0) target = $region9
    $region8: #{tpu_custom_call.1} parent=1 // pred_region
      %s26 = ssub.s32 256, 256
      %27 = vsyncadd [#allocation3], %s26
      %s29 = sshll.u32 [#allocation6], 4
      %s30 = int_to_ptr.vmem [resolvable:$true] %s29
      %32 = dma.hbm_to_vmem [thread:$0]  %s1, 256, %s30, [#allocation3]
    $region9: #{tpu_custom_call.1} parent=1 // pred_fallthru
      _
    // Predicated region
    $region10: #{tpu_custom_call.1} parent=1 // pred_check
      _
    $region11: #{tpu_custom_call.1} parent=1 // pred_check_branch
      %34 = sbr.rel (0) target = $region13
    $region12: #{tpu_custom_call.1} parent=1 // pred_region
      %s36 = ssub.s32 8192, 8192
      %37 = vsyncadd [#allocation8], %s36
      %s38 = sshll.u32 [#allocation7], 4
      %s39 = int_to_ptr.vmem [resolvable:$true] %s38
      %44 = dma.hbm_to_vmem [thread:$0]  %s2, 8192, %s39, [#allocation8], 256, 256, 16
    $region13: #{tpu_custom_call.1} parent=1 // pred_fallthru
      _
    // Predicated region
    $region14: #{tpu_custom_call.1} parent=1 // pred_check
      _
    $region15: #{tpu_custom_call.1} parent=1 // pred_check_branch
      %46 = sbr.rel (0) target = $region17
    $region16: #{tpu_custom_call.1} parent=1 // pred_region
      %47 = dma.done [#allocation5], 16
    $region17: #{tpu_custom_call.1} parent=1 // pred_fallthru
      _
    // Predicated region
    $region18: #{tpu_custom_call.1} parent=1 // pred_check
      _
    $region19: #{tpu_custom_call.1} parent=1 // pred_check_branch
      %49 = sbr.rel (0) target = $region21
    $region20: #{tpu_custom_call.1} parent=1 // pred_region
      %50 = dma.done [#allocation3], 256
    $region21: #{tpu_custom_call.1} parent=1 // pred_fallthru
      _
    // Predicated region
    $region22: #{tpu_custom_call.1} parent=1 // pred_check
      _
    $region23: #{tpu_custom_call.1} parent=1 // pred_check_branch
      %52 = sbr.rel (0) target = $region25
    $region24: #{tpu_custom_call.1} parent=1 // pred_region
      %53 = dma.done [#allocation8], 8192
    $region25: #{tpu_custom_call.1} parent=1 // pred_fallthru
      _
    %54 = sfence
    %s55 = sld [smem:[#allocation2]]
    %s56 = sld [smem:[#allocation2 + $0x1]]
    %v57 = vld [vmem:[#allocation6] sm:$0x1f]
    %v58 = vld [vmem:[#allocation6 + $0x8] sm:$0x1f]
    %v59 = vmul.f32 %v57, %v57
    %v60 = vmul.f32 %v58, %v58
    %vm61 = vcmask 1044480
    %v62 = vsel %vm61, %v59, 0.0
    %v63 = vsel %vm61, %v60, 0.0
    %v64 = vadd.f32 %v62, %v63
    %65 = vadd.xlane.f32.xlu0 %v64
    %v66 = vpop.xlane.xlu0 %65
    %v67 = vrsqrt.pop %v66
    %v68 = vmul.f32 %v57, %v67
    %v69 = vmul.f32 %v58, %v67
    %v70 = vld [vmem:[#allocation7] sm:$0xff]
    %v71 = vld [vmem:[#allocation7 + $0x8] sm:$0xff]
    %v72 = vld [vmem:[#allocation7 + $0x10] sm:$0xff]
    %v73 = vld [vmem:[#allocation7 + $0x18] sm:$0xff]
    %v74 = vld [vmem:[#allocation7 + $0x20] sm:$0xff]
    %v75 = vld [vmem:[#allocation7 + $0x28] sm:$0xff]
    %v76 = vld [vmem:[#allocation7 + $0x30] sm:$0xff]
    %v77 = vld [vmem:[#allocation7 + $0x38] sm:$0xff]
    %v78 = vld [vmem:[#allocation7 + $0x40] sm:$0xff]
    %v79 = vld [vmem:[#allocation7 + $0x48] sm:$0xff]
    %v80 = vld [vmem:[#allocation7 + $0x50] sm:$0xff]
    %v81 = vld [vmem:[#allocation7 + $0x58] sm:$0xff]
    %v82 = vld [vmem:[#allocation7 + $0x60] sm:$0xff]
    %v83 = vld [vmem:[#allocation7 + $0x68] sm:$0xff]
    %v84 = vld [vmem:[#allocation7 + $0x70] sm:$0xff]
    %v85 = vld [vmem:[#allocation7 + $0x78] sm:$0xff]
    %v86 = vld [vmem:[#allocation7 + $0x80] sm:$0xff]
    %v87 = vld [vmem:[#allocation7 + $0x88] sm:$0xff]
    %v88 = vld [vmem:[#allocation7 + $0x90] sm:$0xff]
    %v89 = vld [vmem:[#allocation7 + $0x98] sm:$0xff]
    %v90 = vld [vmem:[#allocation7 + $0xa0] sm:$0xff]
    %v91 = vld [vmem:[#allocation7 + $0xa8] sm:$0xff]
    %v92 = vld [vmem:[#allocation7 + $0xb0] sm:$0xff]
    %v93 = vld [vmem:[#allocation7 + $0xb8] sm:$0xff]
    %v94 = vld [vmem:[#allocation7 + $0xc0] sm:$0xff]
    %v95 = vld [vmem:[#allocation7 + $0xc8] sm:$0xff]
    %v96 = vld [vmem:[#allocation7 + $0xd0] sm:$0xff]
    %v97 = vld [vmem:[#allocation7 + $0xd8] sm:$0xff]
    %v98 = vld [vmem:[#allocation7 + $0xe0] sm:$0xff]
    %v99 = vld [vmem:[#allocation7 + $0xe8] sm:$0xff]
    %v100 = vld [vmem:[#allocation7 + $0xf0] sm:$0xff]
    %v101 = vld [vmem:[#allocation7 + $0xf8] sm:$0xff]
    %v102 = vld [vmem:[#allocation7 + $0x100] sm:$0xff]
    %v103 = vld [vmem:[#allocation7 + $0x108] sm:$0xff]
    %v104 = vld [vmem:[#allocation7 + $0x110] sm:$0xff]
    %v105 = vld [vmem:[#allocation7 + $0x118] sm:$0xff]
    %v106 = vld [vmem:[#allocation7 + $0x120] sm:$0xff]
    %v107 = vld [vmem:[#allocation7 + $0x128] sm:$0xff]
    %v108 = vld [vmem:[#allocation7 + $0x130] sm:$0xff]
    %v109 = vld [vmem:[#allocation7 + $0x138] sm:$0xff]
    %v110 = vld [vmem:[#allocation7 + $0x140] sm:$0xff]
    %v111 = vld [vmem:[#allocation7 + $0x148] sm:$0xff]
    %v112 = vld [vmem:[#allocation7 + $0x150] sm:$0xff]
    %v113 = vld [vmem:[#allocation7 + $0x158] sm:$0xff]
    %v114 = vld [vmem:[#allocation7 + $0x160] sm:$0xff]
    %v115 = vld [vmem:[#allocation7 + $0x168] sm:$0xff]
    %v116 = vld [vmem:[#allocation7 + $0x170] sm:$0xff]
    %v117 = vld [vmem:[#allocation7 + $0x178] sm:$0xff]
    %v118 = vld [vmem:[#allocation7 + $0x180] sm:$0xff]
    %v119 = vld [vmem:[#allocation7 + $0x188] sm:$0xff]
    %v120 = vld [vmem:[#allocation7 + $0x190] sm:$0xff]
    %v121 = vld [vmem:[#allocation7 + $0x198] sm:$0xff]
    %v122 = vld [vmem:[#allocation7 + $0x1a0] sm:$0xff]
    %v123 = vld [vmem:[#allocation7 + $0x1a8] sm:$0xff]
    %v124 = vld [vmem:[#allocation7 + $0x1b0] sm:$0xff]
    %v125 = vld [vmem:[#allocation7 + $0x1b8] sm:$0xff]
    %v126 = vld [vmem:[#allocation7 + $0x1c0] sm:$0xff]
    %v127 = vld [vmem:[#allocation7 + $0x1c8] sm:$0xff]
    %v128 = vld [vmem:[#allocation7 + $0x1d0] sm:$0xff]
    %v129 = vld [vmem:[#allocation7 + $0x1d8] sm:$0xff]
    %v130 = vld [vmem:[#allocation7 + $0x1e0] sm:$0xff]
    %v131 = vld [vmem:[#allocation7 + $0x1e8] sm:$0xff]
    %v132 = vld [vmem:[#allocation7 + $0x1f0] sm:$0xff]
    %v133 = vld [vmem:[#allocation7 + $0x1f8] sm:$0xff]
    %134 = vmatprep.subr.mxu0 %v71
    %135 = vmatpush1.xpose.msra.mxu0 %v70
    %136 = vmatprep.subr.mxu0 %v73
    %137 = vmatpush1.xpose.msra.mxu0 %v72
    %138 = vmatprep.subr.mxu0 %v75
    %139 = vmatpush1.xpose.msra.mxu0 %v74
    %140 = vmatprep.subr.mxu0 %v77
    %141 = vmatpush1.xpose.msra.mxu0 %v76
    %142 = vmatprep.subr.mxu0 %v79
    %143 = vmatpush1.xpose.msra.mxu0 %v78
    %144 = vmatprep.subr.mxu0 %v81
    %145 = vmatpush1.xpose.msra.mxu0 %v80
    %146 = vmatprep.subr.mxu0 %v83
    %147 = vmatpush1.xpose.msra.mxu0 %v82
    %148 = vmatprep.subr.mxu0 %v85
    %149 = vmatpush1.xpose.msra.mxu0 %v84
    %150 = vmatprep.subr.mxu0 %v87
    %151 = vmatpush1.xpose.msra.mxu0 %v86
    %152 = vmatprep.subr.mxu0 %v89
    %153 = vmatpush1.xpose.msra.mxu0 %v88
    %154 = vmatprep.subr.mxu0 %v91
    %155 = vmatpush1.xpose.msra.mxu0 %v90
    %156 = vmatprep.subr.mxu0 %v93
    %157 = vmatpush1.xpose.msra.mxu0 %v92
    %158 = vmatprep.subr.mxu0 %v95
    %159 = vmatpush1.xpose.msra.mxu0 %v94
    %160 = vmatprep.subr.mxu0 %v97
    %161 = vmatpush1.xpose.msra.mxu0 %v96
    %162 = vmatprep.subr.mxu0 %v99
    %163 = vmatpush1.xpose.msra.mxu0 %v98
    %164 = vmatprep.subr.mxu0 %v101
    %165 = vmatpush1.xpose.msra.mxu0 %v100
    %166 = vmatprep.subr.mxu0 %v103
    %167 = vmatpush1.xpose.msra.mxu0 %v102
    %168 = vmatprep.subr.mxu0 %v105
    %169 = vmatpush1.xpose.msra.mxu0 %v104
    %170 = vmatprep.subr.mxu0 %v107
    %171 = vmatpush1.xpose.msra.mxu0 %v106
    %172 = vmatprep.subr.mxu0 %v109
    %173 = vmatpush1.xpose.msra.mxu0 %v108
    %174 = vmatprep.subr.mxu0 %v111
    %175 = vmatpush1.xpose.msra.mxu0 %v110
    %176 = vmatprep.subr.mxu0 %v113
    %177 = vmatpush1.xpose.msra.mxu0 %v112
    %178 = vmatprep.subr.mxu0 %v115
    %179 = vmatpush1.xpose.msra.mxu0 %v114
    %180 = vmatprep.subr.mxu0 %v117
    %181 = vmatpush1.xpose.msra.mxu0 %v116
    %182 = vmatprep.subr.mxu0 %v119
    %183 = vmatpush1.xpose.msra.mxu0 %v118
    %184 = vmatprep.subr.mxu0 %v121
    %185 = vmatpush1.xpose.msra.mxu0 %v120
    %186 = vmatprep.subr.mxu0 %v123
    %187 = vmatpush1.xpose.msra.mxu0 %v122
    %188 = vmatprep.subr.mxu0 %v125
    %189 = vmatpush1.xpose.msra.mxu0 %v124
    %190 = vmatprep.subr.mxu0 %v127
    %191 = vmatpush1.xpose.msra.mxu0 %v126
    %192 = vmatprep.subr.mxu0 %v129
    %193 = vmatpush1.xpose.msra.mxu0 %v128
    %194 = vmatprep.subr.mxu0 %v131
    %195 = vmatpush1.xpose.msra.mxu0 %v130
    %196 = vmatprep.subr.mxu0 %v133
    %197 = vmatpush1.xpose.msra.mxu0 %v132
    %198 = vmatprep.mubr.f32.mxu0 %v69
    %199 = vmatmul.mubr.f32.gmra.mrb[0].mxu0 %v68
    %v200 = vpop.f32.mrb[0].mxu0
    %v201 = vadd.f32 0.0, %v200
    %v202 = vpop.f32.mrb[0].mxu0
    %v203 = vadd.f32 0.0, %v202
    %204 = vdwg.mxu0
    %v205 = vstv %s55
    %v206 = vmul.f32 %v201, %v205
    %v207 = vmul.f32 %v203, %v205
    %v208 = vlaneseq
    %v209 = vand.u32 %v208, 127
    %v210 = vadd.s32 %v209, 128
    %vm211 = vcmp.lt.s32.totalorder %v209, 200
    %vm212 = vcmp.lt.s32.totalorder %v210, 200
    %v213 = vsel %vm211, %v206, -3.4028235e+38
    %v214 = vsel %vm212, %v207, -3.4028235e+38
    %v215 = vsel %vm61, %v213, -inf
    %v216 = vsel %vm61, %v214, -inf
    %v217 = vmax.f32 %v215, %v216
    %218 = vmax.xlane.f32.xlu0 %v217
    %v219 = vpop.xlane.xlu0 %218
    %v220 = vsub.f32 %v213, %v219
    %v221 = vsub.f32 %v214, %v219
    %v222 = vmul.f32 %v220, 1.442695
    %v223 = vpow.pop %v222
    %v224 = vmul.f32 %v221, 1.442695
    %v225 = vpow.pop %v224
    %v226 = vsel %vm61, %v223, 0.0
    %v227 = vsel %vm61, %v225, 0.0
    %v228 = vadd.f32 %v226, %v227
    %229 = vadd.xlane.f32.xlu0 %v228
    %v230 = vpop.xlane.xlu0 %229
    %v231 = vrcp.pop %v230
    %v232 = vmul.f32 %v223, %v231
    %v233 = vmul.f32 %v225, %v231
    %vm234 = vcmask 1044481
    %v235 = vsel %vm234, %v232, -inf
    %v236 = vrot.slane %v235, 4
    %v237 = vmax.f32 %v235, %v236
    %v238 = vrot.slane %v237, 2
    %v239 = vmax.f32 %v237, %v238
    %v240 = vrot.slane %v239, 1
    %v241 = vmax.f32 %v239, %v240
    %v242 = vsel %vm234, %v233, -inf
    %v243 = vrot.slane %v242, 4
    %v244 = vmax.f32 %v242, %v243
    %v245 = vrot.slane %v244, 2
    %v246 = vmax.f32 %v244, %v245
    %v247 = vrot.slane %v246, 1
    %v248 = vmax.f32 %v246, %v247
    %v249 = vadd.f32 %v232, %v241
    %v250 = vadd.f32 %v233, %v248
    %v251 = vmul.f32 %v249, 0.5
    %v252 = vmul.f32 %v250, 0.5
    %v255 = vcombine.low %v251, %v252
    %v257 = vunpack.c.l.s4 1966171168
    %v258 = vunpack.c.0.s8 %v257
    %v259 = vlaneseq
    %v260 = vshrl.u32 %v259, 7
    %v261 = vsub.s32 %v258, %v260
    %v262 = vrot.slane %v255, %v261
    %v264 = vunpack.c.l.s4 1966171168
    %v265 = vunpack.c.0.s8 %v264
    %v266 = vlaneseq
    %v267 = vshrl.u32 %v266, 7
    %v268 = vsub.s32 %v265, %v267
    %v269 = vrot.slane %v262, %v268
    %v271 = vlaneseq
    %vm272 = vcmp.ge.s32.totalorder %v271, 0
    %vm273 = vcmp.lt.s32.totalorder %v271, 256
    %vm274 = vmand %vm272, %vm273
    %275 = vst.msk [vmem:[#allocation9] sm:$0x3] %vm274, %v269
    %v276 = vstv %s56
    %vm277 = vcmp.gt.f32.partialorder %v251, %v276
    %vm278 = vcmp.gt.f32.partialorder %v252, %v276
    %v279 = vsel %vm277, 1, 0
    %v280 = vsel %vm278, 1, 0
    %v281 = vcombine.low %v279, %v280
    %v283 = vunpack.c.l.s4 1966171168
    %v284 = vunpack.c.0.s8 %v283
    %v285 = vlaneseq
    %v286 = vshrl.u32 %v285, 7
    %v287 = vsub.s32 %v284, %v286
    %v288 = vrot.slane %v281, %v287
    %v290 = vunpack.c.l.s4 1966171168
    %v291 = vunpack.c.0.s8 %v290
    %v292 = vlaneseq
    %v293 = vshrl.u32 %v292, 7
    %v294 = vsub.s32 %v291, %v293
    %v295 = vrot.slane %v288, %v294
    %296 = vst.msk [vmem:[#allocation10] sm:$0x3] %vm274, %v295
    // Predicated region
    $region26: #{tpu_custom_call.1} parent=1 // pred_check
      _
    $region27: #{tpu_custom_call.1} parent=1 // pred_check_branch
      %298 = sbr.rel (0) target = $region29
    $region28: #{tpu_custom_call.1} parent=1 // pred_region
      %s300 = ssub.s32 32, 32
      %301 = vsyncadd [#allocation4], %s300
      %s303 = sshll.u32 [#allocation9], 4
      %s304 = int_to_ptr.vmem [resolvable:$true] %s303
      %306 = dma.vmem_to_hbm [thread:$0]  %s304, 32, %s3, [#allocation4]
    $region29: #{tpu_custom_call.1} parent=1 // pred_fallthru
      _
    // Predicated region
    $region30: #{tpu_custom_call.1} parent=1 // pred_check
      _
    $region31: #{tpu_custom_call.1} parent=1 // pred_check_branch
      %308 = sbr.rel (0) target = $region33
    $region32: #{tpu_custom_call.1} parent=1 // pred_region
      %s310 = ssub.s32 32, 32
      %311 = vsyncadd [#allocation11], %s310
      %s313 = sshll.u32 [#allocation10], 4
      %s314 = int_to_ptr.vmem [resolvable:$true] %s313
      %316 = dma.vmem_to_hbm [thread:$0]  %s314, 32, %s4, [#allocation11]
    $region33: #{tpu_custom_call.1} parent=1 // pred_fallthru
      _
    // Predicated region
    $region34: #{tpu_custom_call.1} parent=1 // pred_check
      _
    $region35: #{tpu_custom_call.1} parent=1 // pred_check_branch
      %318 = sbr.rel (0) target = $region37
    $region36: #{tpu_custom_call.1} parent=1 // pred_region
      %319 = dma.done [#allocation4], 32
    $region37: #{tpu_custom_call.1} parent=1 // pred_fallthru
      _
    // Predicated region
    $region38: #{tpu_custom_call.1} parent=1 // pred_check
      _
    $region39: #{tpu_custom_call.1} parent=1 // pred_check_branch
      %321 = sbr.rel (0) target = $region41
    $region40: #{tpu_custom_call.1} parent=1 // pred_region
      %322 = dma.done [#allocation11], 32
    $region41: #{tpu_custom_call.1} parent=1 // pred_fallthru
      _
    %323 = vsyncpa [#allocation3], 1
    %324 = vsyncpa [#allocation8], 1
    %325 = vsyncpa [#allocation4], 1
    %326 = vsyncpa [#allocation11], 1
    %327 = vsyncpa [#allocation5], 1

</llo_original>
